<compile_context>
chip_gen: v6e
topology: v6e:2x2x1
jax: 0.10.0
libtpu: 0.0.40
codegen_flags: <defaults>
</compile_context>

<pallas_src>
import jax
import jax.numpy as jnp
from jax.experimental import pallas as pl
from jax.experimental.pallas import tpu as pltpu

_LANE = 128
_SUBLANE = 8


def _kl_partial_kernel(q_ref, p_ref, o_ref):
    """One batch tile: (TB, C_pad) -> (8, 128) lane/sublane-resident partial."""
    q = q_ref[...].astype(jnp.float32)          # (TB, C_pad)
    p = p_ref[...].astype(jnp.float32)          # (TB, C_pad)
    # xlogy convention: contribution is 0 where p == 0 (also covers padding).
    # log2(p) - log2(q) avoids an intermediate p/q that can over/underflow.
    contrib = jnp.where(p > 0.0, p * (jnp.log2(p) - jnp.log2(q)), 0.0)
    tb, c = contrib.shape
    # Regroup into (K, 8, 128) vreg tiles and reduce over the leading axis:
    # K-1 elementwise vector adds (VPU only) -> stays hidden under the DMA.
    contrib = contrib.reshape(tb * c // (_SUBLANE * _LANE), _SUBLANE, _LANE)
    o_ref[...] = jnp.sum(contrib, axis=0)       # (8, 128), unmasked vst


def _round_up(x, m):
    return ((x + m - 1) // m) * m


def kl_regular(q_pred: jax.Array, p_targ: jax.Array, *, tb: int | None = None,
               vmem_budget_bytes: int = 32 * 1024 * 1024) -> jax.Array:
    """Pallas equivalent of KLregular.forward(Q_pred, P_targ)."""
    assert q_pred.shape == p_targ.shape and q_pred.ndim == 2
    B, C = q_pred.shape

    # Lane-pad the class dim; padded entries contribute exactly 0.
    C_pad = _round_up(C, _LANE)

    # Row tile: up to 512 rows, multiple of 8, capped by the VMEM budget for
    # 2 inputs x 2 pipeline buffers (re-derived per dtype; conservative for
    # v7x's smaller VMEM).
    if tb is None:
        itemsize = max(q_pred.dtype.itemsize, p_targ.dtype.itemsize)
        cap = vmem_budget_bytes // (2 * 2 * C_pad * itemsize)
        tb = max(_SUBLANE, min(512, (cap // _SUBLANE) * _SUBLANE))
    tb = max(_SUBLANE, (tb // _SUBLANE) * _SUBLANE)
    if B <= tb:
        tb = _round_up(B, _SUBLANE)
    B_pad = _round_up(B, tb)
    num_tiles = B_pad // tb

    pad_b, pad_c = B_pad - B, C_pad - C
    if pad_b or pad_c:
        # Pad with 1.0: 1 * (log2(1) - log2(1)) == 0, no special casing needed.
        q_pred = jnp.pad(q_pred, ((0, pad_b), (0, pad_c)), constant_values=1.0)
        p_targ = jnp.pad(p_targ, ((0, pad_b), (0, pad_c)), constant_values=1.0)

    in_bytes = (q_pred.dtype.itemsize + p_targ.dtype.itemsize) * B_pad * C_pad
    partials = pl.pallas_call(
        _kl_partial_kernel,
        out_shape=jax.ShapeDtypeStruct((num_tiles * _SUBLANE, _LANE),
                                       jnp.float32),
        grid_spec=pltpu.PrefetchScalarGridSpec(
            num_scalar_prefetch=0,
            grid=(num_tiles,),
            in_specs=[
                pl.BlockSpec((tb, C_pad), lambda i: (i, 0)),
                pl.BlockSpec((tb, C_pad), lambda i: (i, 0)),
            ],
            out_specs=pl.BlockSpec((_SUBLANE, _LANE), lambda i: (i, 0)),
        ),
        compiler_params=pltpu.CompilerParams(
            dimension_semantics=("parallel",),   # shard tiles across TCs (v7x)
        ),
        cost_estimate=pl.CostEstimate(
            flops=3 * B_pad * C_pad,
            transcendentals=2 * B_pad * C_pad,
            bytes_accessed=in_bytes + num_tiles * _SUBLANE * _LANE * 4,
        ),
    )(q_pred, p_targ)

    # Single cross-lane/sublane/tile reduce + mean over the *original* batch.
    return jnp.sum(partials) / B


if __name__ == "__main__":
    key = jax.random.PRNGKey(0)
    kq, kp = jax.random.split(key)

    # Test 1: small aligned shape (batch=8, classes=128), single tile.
    B, C = 8, 128
    Q_pred = jax.nn.softmax(jax.random.normal(kq, (B, C), jnp.float32), axis=1)
    P_targ = jax.nn.softmax(jax.random.normal(kp, (B, C), jnp.float32), axis=1)
    result = kl_regular(Q_pred, P_targ)
    jax.block_until_ready(result)
    ref = jnp.mean(jnp.sum(P_targ * jnp.log2(P_targ / Q_pred), axis=1))
    assert jnp.allclose(result, ref, rtol=1e-5, atol=1e-5), (result, ref)

    # Test 2: unaligned shape + multi-tile grid (tb=8 -> 3 tiles, with
    # row/column padding exercised).
    kq2, kp2 = jax.random.split(jax.random.PRNGKey(1))
    B2, C2 = 20, 200
    Q2 = jax.nn.softmax(jax.random.normal(kq2, (B2, C2), jnp.float32), axis=1)
    P2 = jax.nn.softmax(jax.random.normal(kp2, (B2, C2), jnp.float32), axis=1)
    result2 = kl_regular(Q2, P2, tb=8)
    jax.block_until_ready(result2)
    ref2 = jnp.mean(jnp.sum(P2 * jnp.log2(P2 / Q2), axis=1))
    assert jnp.allclose(result2, ref2, rtol=1e-5, atol=1e-5), (result2, ref2)

    print("KERNEL_OK")
</pallas_src>

<mosaic_0001>
module attributes {stable_mosaic.version = 11 : i64} {
  func.func @_kl_partial_kernel(%arg0: i32, %arg1: memref<8x128xf32, #tpu.memory_space<vmem>>, %arg2: memref<8x128xf32, #tpu.memory_space<vmem>>, %arg3: memref<8x128xf32, #tpu.memory_space<vmem>>) attributes {dimension_semantics = [#tpu.dimension_semantics<parallel>], iteration_bounds = array<i64: 1>, scalar_prefetch = 0 : i64, scratch_operands = 0 : i64, tpu.core_type = #tpu.core_type<tc>, window_params = [{transform_indices = @transform_0, window_bounds = array<i64: 8, 128>}, {transform_indices = @transform_1, window_bounds = array<i64: 8, 128>}, {transform_indices = @transform_2, window_bounds = array<i64: 8, 128>}]} {
    %c0 = arith.constant 0 : index
    %c0_0 = arith.constant 0 : index
    %0 = vector.load %arg1[%c0, %c0_0] : memref<8x128xf32, #tpu.memory_space<vmem>>, vector<8x128xf32>
    %c0_1 = arith.constant 0 : index
    %c0_2 = arith.constant 0 : index
    %1 = vector.load %arg2[%c0_1, %c0_2] : memref<8x128xf32, #tpu.memory_space<vmem>>, vector<8x128xf32>
    %cst = arith.constant 0.000000e+00 : f32
    %2 = vector.broadcast %cst : f32 to vector<8x128xf32>
    %3 = arith.cmpf ogt, %1, %2 : vector<8x128xf32>
    %4 = math.log %1 : vector<8x128xf32>
    %cst_3 = arith.constant 2.000000e+00 : f32
    %5 = math.log %cst_3 : f32
    %6 = vector.broadcast %5 : f32 to vector<8x128xf32>
    %7 = arith.divf %4, %6 : vector<8x128xf32>
    %8 = math.log %0 : vector<8x128xf32>
    %cst_4 = arith.constant 2.000000e+00 : f32
    %9 = math.log %cst_4 : f32
    %10 = vector.broadcast %9 : f32 to vector<8x128xf32>
    %11 = arith.divf %8, %10 : vector<8x128xf32>
    %12 = arith.subf %7, %11 : vector<8x128xf32>
    %13 = arith.mulf %1, %12 : vector<8x128xf32>
    %cst_5 = arith.constant 0.000000e+00 : f32
    %14 = vector.broadcast %cst_5 : f32 to vector<8x128xf32>
    %15 = arith.select %3, %13, %14 : vector<8x128xi1>, vector<8x128xf32>
    %16 = vector.shape_cast %15 : vector<8x128xf32> to vector<1x8x128xf32>
    %cst_6 = arith.constant dense<0.000000e+00> : vector<8x128xf32>
    %17 = vector.multi_reduction <add>, %16, %cst_6 [0] : vector<1x8x128xf32> to vector<8x128xf32>
    %c0_7 = arith.constant 0 : index
    %c0_8 = arith.constant 0 : index
    %18 = vector.load %arg3[%c0_7, %c0_8] : memref<8x128xf32, #tpu.memory_space<vmem>>, vector<8x128xf32>
    tpu.vector_store %arg3[%c0_7, %c0_8], %17 {strides = array<i32>} : memref<8x128xf32, #tpu.memory_space<vmem>>, vector<8x128xf32>,
    return
  }
  func.func @transform_0(%arg0: i32) -> (i32, i32) {
    %c0_i32 = arith.constant 0 : i32
    %c0_i32_0 = arith.constant 0 : i32
    return %arg0, %c0_i32 : i32, i32
  }
  func.func @transform_1(%arg0: i32) -> (i32, i32) {
    %c0_i32 = arith.constant 0 : i32
    %c0_i32_0 = arith.constant 0 : i32
    return %arg0, %c0_i32 : i32, i32
  }
  func.func @transform_2(%arg0: i32) -> (i32, i32) {
    %c0_i32 = arith.constant 0 : i32
    %c0_i32_0 = arith.constant 0 : i32
    return %arg0, %c0_i32 : i32, i32
  }
}

</mosaic_0001>

<llo_original>
// kernel: tpu_custom_call.1
$region0: #{tpu_custom_call.1}
  #allocation0 [shape = 'u32[]', space=smem, size = 0x4, offset = 0x4, fixed_abs, tag = 'smem constant byte address 0x4 - core index']
  #allocation1 [shape = 'u32[144,128]{1,0:T(1,128)}', space=vmem, size = 0x12000, scoped, tag = 'internal scratch']
  %s0 = inlined_call_operand.hbm [shape: f32[8,128], index: 0, kind: input, shape index: {}]
  %s1 = inlined_call_operand.hbm [shape: f32[8,128], index: 1, kind: input, shape index: {}]
  %s2 = inlined_call_operand.hbm [shape: f32[8,128], index: 2, kind: output, shape index: {}]
  %s3 = sld [smem:[#allocation0]]
  $region26: #{tpu_custom_call.1} parent=0
    _
  %s5 = ssub.s32 1, %s3
  %s6 = scalar_select 0, %s5, %s3
  $region1: #{tpu_custom_call.1} parent=0
    #allocation2 [shape = 'u8[4096]{0}', space=vmem, size = 0x1000, scoped, tag = 'input window, operand 0, single buffered']
    #allocation3 [shape = 's32[1]{0}', space=sflag, size = 0x4, scoped, tag = 'scoped memory for tpu_custom_call.1']
    #allocation4 [shape = 's32[1]{0}', space=sflag, size = 0x4, scoped, tag = 'scoped memory for tpu_custom_call.1']
    #allocation5 [shape = 'u8[4096]{0}', space=vmem, size = 0x1000, scoped, tag = 'input window, operand 1, single buffered']
    #allocation6 [shape = 's32[1]{0}', space=sflag, size = 0x4, scoped, tag = 'scoped memory for tpu_custom_call.1']
    #allocation7 [shape = 'u8[4096]{0}', space=vmem, size = 0x1000, scoped, tag = 'output window, operand 0, single buffered']
    %7 = vsyncpa [#allocation3], 0
    %8 = vsyncpa [#allocation6], 0
    %9 = vsyncpa [#allocation4], 0
    // Predicated region
    $region2: #{tpu_custom_call.1} parent=1 // pred_check
      _
    $region3: #{tpu_custom_call.1} parent=1 // pred_check_branch
      %11 = sbr.rel (0) target = $region5
    $region4: #{tpu_custom_call.1} parent=1 // pred_region
      %s13 = ssub.s32 128, 128
      %14 = vsyncadd [#allocation3], %s13
      %s16 = sshll.u32 [#allocation2], 4
      %s17 = int_to_ptr.vmem [resolvable:$true] %s16
      %19 = dma.hbm_to_vmem [thread:$0]  %s0, 128, %s17, [#allocation3]
    $region5: #{tpu_custom_call.1} parent=1 // pred_fallthru
      _
    // Predicated region
    $region6: #{tpu_custom_call.1} parent=1 // pred_check
      _
    $region7: #{tpu_custom_call.1} parent=1 // pred_check_branch
      %21 = sbr.rel (0) target = $region9
    $region8: #{tpu_custom_call.1} parent=1 // pred_region
      %s23 = ssub.s32 128, 128
      %24 = vsyncadd [#allocation6], %s23
      %s26 = sshll.u32 [#allocation5], 4
      %s27 = int_to_ptr.vmem [resolvable:$true] %s26
      %29 = dma.hbm_to_vmem [thread:$0]  %s1, 128, %s27, [#allocation6]
    $region9: #{tpu_custom_call.1} parent=1 // pred_fallthru
      _
    // Predicated region
    $region10: #{tpu_custom_call.1} parent=1 // pred_check
      _
    $region11: #{tpu_custom_call.1} parent=1 // pred_check_branch
      %31 = sbr.rel (0) target = $region13
    $region12: #{tpu_custom_call.1} parent=1 // pred_region
      %32 = dma.done [#allocation3], 128
    $region13: #{tpu_custom_call.1} parent=1 // pred_fallthru
      _
    // Predicated region
    $region14: #{tpu_custom_call.1} parent=1 // pred_check
      _
    $region15: #{tpu_custom_call.1} parent=1 // pred_check_branch
      %34 = sbr.rel (0) target = $region17
    $region16: #{tpu_custom_call.1} parent=1 // pred_region
      %35 = dma.done [#allocation6], 128
    $region17: #{tpu_custom_call.1} parent=1 // pred_fallthru
      _
    %v36 = vld [vmem:[#allocation2] sm:$0xff]
    %v37 = vld [vmem:[#allocation5] sm:$0xff]
    %vm38 = vcmp.gt.f32.partialorder %v37, 0.0
    %v39 = vlog2.pop %v37
    %v40 = vmul.f32 %v39, 0.6931472
    %v41 = vrcp.pop 0.6931472
    %v42 = vmul.f32 %v40, %v41
    %v43 = vlog2.pop %v36
    %v44 = vmul.f32 %v43, 0.6931472
    %v45 = vmul.f32 %v44, %v41
    %v46 = vsub.f32 %v42, %v45
    %v47 = vmul.f32 %v37, %v46
    %v48 = vsel %vm38, %v47, 0.0
    %v49 = vadd.f32 %v48, 0.0
    %50 = vst [vmem:[#allocation7] sm:$0xff] %v49
    // Predicated region
    $region18: #{tpu_custom_call.1} parent=1 // pred_check
      _
    $region19: #{tpu_custom_call.1} parent=1 // pred_check_branch
      %52 = sbr.rel (0) target = $region21
    $region20: #{tpu_custom_call.1} parent=1 // pred_region
      %s54 = ssub.s32 128, 128
      %55 = vsyncadd [#allocation4], %s54
      %s57 = sshll.u32 [#allocation7], 4
      %s58 = int_to_ptr.vmem [resolvable:$true] %s57
      %60 = dma.vmem_to_hbm [thread:$0]  %s58, 128, %s2, [#allocation4]
    $region21: #{tpu_custom_call.1} parent=1 // pred_fallthru
      _
    // Predicated region
    $region22: #{tpu_custom_call.1} parent=1 // pred_check
      _
    $region23: #{tpu_custom_call.1} parent=1 // pred_check_branch
      %62 = sbr.rel (0) target = $region25
    $region24: #{tpu_custom_call.1} parent=1 // pred_region
      %63 = dma.done [#allocation4], 128
    $region25: #{tpu_custom_call.1} parent=1 // pred_fallthru
      _
    %64 = vsyncpa [#allocation3], 1
    %65 = vsyncpa [#allocation6], 1
    %66 = vsyncpa [#allocation4], 1

</llo_original>
